<compile_context>
chip_gen: v7x
topology: tpu7x:2x2x1
jax: 0.10.0
libtpu: 0.0.40
codegen_flags: <defaults>
</compile_context>

<pallas_src>
import functools

import jax
import jax.numpy as jnp
from jax.experimental import pallas as pl
from jax.experimental.pallas import tpu as pltpu


def bottleneck_kernel(x_ref, w1_ref, w2_ref, w3_ref, t_ref, out_ref, *, row_len):
    # x_ref / out_ref: (C, nb*L)  -- channels on sublanes, merged batch*L on lanes.
    # w1_ref: (C, C)    1x1 conv, BN scale folded in
    # w2_ref: (C, 3C)   k=3 conv, taps im2col'd along the contraction dim, BN folded
    # w3_ref: (C, C)    1x1 conv, BN scale folded in
    # t_ref:  (C, 3)    folded per-channel shifts (bias*scale + shift), one col/layer
    x = x_ref[...]                                   # (C, NL) f32
    w1 = w1_ref[...]
    w2 = w2_ref[...]
    w3 = w3_ref[...]
    t1 = t_ref[:, 0:1]
    t2 = t_ref[:, 1:2]
    t3 = t_ref[:, 2:3]

    # Loop-invariant lane masks, built once per grid step.  `row_len` (= L) is
    # static; pos == position within each batch row of the merged lane axis, so
    # the k=3 zero-padding is applied at every batch-row boundary.
    nl = x.shape[1]
    lane = jax.lax.broadcasted_iota(jnp.int32, x.shape, 1)
    pos = jax.lax.rem(lane, row_len)
    first = pos == 0                                  # left zero-pad column of each row
    last = pos == row_len - 1                         # right zero-pad column of each row
    zeros = jnp.zeros_like(x)

    # layer1: 1x1 conv + folded BN + ReLU   (Dropout = identity in eval mode)
    h = jnp.maximum(jnp.dot(w1, x, preferred_element_type=jnp.float32) + t1, 0.0)

    # layer2: k=3 conv (pad=1) as ONE matmul over the im2col'd taps (K = 3C).
    # Shifted copies via XLU rolls + per-row boundary masks (no per-row loop).
    prev = jnp.where(first, zeros, pltpu.roll(h, shift=1, axis=1))        # h[:, l-1]
    nxt = jnp.where(last, zeros, pltpu.roll(h, shift=nl - 1, axis=1))     # h[:, l+1]
    him = jnp.concatenate([prev, h, nxt], axis=0)                         # (3C, NL)
    h = jnp.maximum(jnp.dot(w2, him, preferred_element_type=jnp.float32) + t2, 0.0)

    # conv + bn (1x1 conv, folded BN)
    h = jnp.dot(w3, h, preferred_element_type=jnp.float32) + t3

    # += identity, ReLU.  (Dropout(0.1) is identity in eval mode.)
    out_ref[...] = jnp.maximum(h + x, 0.0).astype(out_ref.dtype)
    # TODO(synk): training-mode Dropout(0.1) (scaled Bernoulli mask via
    # pltpu.prng_random_bits) omitted — eval-mode forward is implemented.


def _fold_bn(gamma, beta, mean, var, eps=1e-5):
    scale = gamma / jnp.sqrt(var + eps)
    shift = beta - mean * scale
    return scale.astype(jnp.float32), shift.astype(jnp.float32)


def _pick_batch_block(N, C, L, itemsize=4, budget_bytes=16 << 20):
    # VMEM guardrail (matters on v7x: 64 MiB physical / 32 MiB scoped default,
    # half of v5e/v6e).  Block footprint ~= (in + out) * double-buffering.
    nb = N
    while nb > 1 and 4 * nb * C * L * itemsize > budget_bytes:
        nb -= 1
        while nb > 1 and N % nb:
            nb -= 1
    return nb


def bottleneck_residual_block3(x_ncl, p, *, batch_block=None):
    """x_ncl: (N, C, L) float32 in PyTorch NCL layout. Returns (N, C, L)."""
    N, Cin, L = x_ncl.shape
    Cout = p["w1"].shape[0]
    # The PyTorch forward does `out += identity`, which requires Cin == Cout.
    assert Cin == Cout, "identity add requires in_channels == out_channels"
    assert L % 128 == 0, "L must be a multiple of 128 (lane-dense blocks); pad L"
    C = Cout

    # Fold conv bias + eval-mode BatchNorm into the conv weights (numerically exact).
    s1, sh1 = _fold_bn(p["g1"], p["be1"], p["m1"], p["v1"])
    s2, sh2 = _fold_bn(p["g2"], p["be2"], p["m2"], p["v2"])
    s3, sh3 = _fold_bn(p["g3"], p["be3"], p["m3"], p["v3"])

    w1 = (p["w1"][:, :, 0] * s1[:, None]).astype(jnp.float32)                 # (C, C)
    # (Cout, Cmid, 3) -> (Cout, 3*Cmid) with index [co, k*C + ci] = w2[co, ci, k]
    w2m = jnp.transpose(p["w2"], (0, 2, 1)).reshape(C, 3 * C)
    w2 = (w2m * s2[:, None]).astype(jnp.float32)                              # (C, 3C)
    w3 = (p["w3"][:, :, 0] * s3[:, None]).astype(jnp.float32)                 # (C, C)

    t1 = p["b1"] * s1 + sh1
    t2 = p["b2"] * s2 + sh2
    t3 = p["b3"] * s3 + sh3
    tpack = jnp.stack([t1, t2, t3], axis=1).astype(jnp.float32)               # (C, 3)

    # Grid: one step by default (overhead-bound regime); re-tile the batch only
    # if the whole-N block would not fit VMEM comfortably.
    if batch_block is None:
        nb = _pick_batch_block(N, C, L)
    else:
        nb = batch_block
    assert N % nb == 0, "batch_block must divide N"
    grid = (N // nb,)
    nlb = nb * L

    # Present the activations as one lane-dense (C, N*L) slab (layout plumbing
    # only; the two wrapper transposes are tiny XLA ops at these sizes).
    x_cl = jnp.transpose(x_ncl.astype(jnp.float32), (1, 0, 2)).reshape(C, N * L)

    flops = 2 * C * (C + 3 * C + C) * L * N
    bytes_accessed = 2 * N * C * L * 4 + (C * C + C * 3 * C + C * C + C * 3) * 4
    cost = pl.CostEstimate(flops=flops, transcendentals=0,
                           bytes_accessed=bytes_accessed)

    kern = functools.partial(bottleneck_kernel, row_len=L)

    out_cl = pl.pallas_call(
        kern,
        out_shape=jax.ShapeDtypeStruct((C, N * L), jnp.float32),
        grid=grid,
        in_specs=[
            pl.BlockSpec((C, nlb), lambda b: (0, b)),
            pl.BlockSpec((C, C), lambda b: (0, 0)),
            pl.BlockSpec((C, 3 * C), lambda b: (0, 0)),
            pl.BlockSpec((C, C), lambda b: (0, 0)),
            pl.BlockSpec((C, 3), lambda b: (0, 0)),
        ],
        out_specs=pl.BlockSpec((C, nlb), lambda b: (0, b)),
        compiler_params=pltpu.CompilerParams(dimension_semantics=("parallel",)),
        cost_estimate=cost,
    )(x_cl, w1, w2, w3, tpack)

    return out_cl.reshape(C, N, L).transpose(1, 0, 2)


# ---------------- pure-JAX reference (eval-mode PyTorch semantics) -------------
def _ref_conv1d(x, w, b, pad):
    y = jax.lax.conv_general_dilated(
        x, w, window_strides=(1,), padding=[(pad, pad)],
        dimension_numbers=("NCH", "OIH", "NCH"))
    return y + b[None, :, None]


def _ref_bn(x, gamma, beta, mean, var, eps=1e-5):
    return ((x - mean[None, :, None]) / jnp.sqrt(var[None, :, None] + eps)
            * gamma[None, :, None] + beta[None, :, None])


def bottleneck_residual_block3_ref(x, p):
    identity = x
    out = jax.nn.relu(_ref_bn(_ref_conv1d(x, p["w1"], p["b1"], 0),
                              p["g1"], p["be1"], p["m1"], p["v1"]))
    out = jax.nn.relu(_ref_bn(_ref_conv1d(out, p["w2"], p["b2"], 1),
                              p["g2"], p["be2"], p["m2"], p["v2"]))
    out = _ref_bn(_ref_conv1d(out, p["w3"], p["b3"], 0),
                  p["g3"], p["be3"], p["m3"], p["v3"])
    out = out + identity
    return jax.nn.relu(out)


# --------------------------------- main ---------------------------------------
if __name__ == "__main__":
    N, C, L = 4, 8, 256  # in_channels == out_channels (required by `out += identity`)

    key = jax.random.PRNGKey(0)
    ks = jax.random.split(key, 24)
    r = lambda k, s, sc=0.2: (sc * jax.random.normal(k, s)).astype(jnp.float32)
    pos = lambda k, s: (0.5 + jax.random.uniform(k, s)).astype(jnp.float32)

    params = {
        "w1": r(ks[0], (C, C, 1)), "b1": r(ks[1], (C,)),
        "g1": pos(ks[2], (C,)), "be1": r(ks[3], (C,)),
        "m1": r(ks[4], (C,)), "v1": pos(ks[5], (C,)),
        "w2": r(ks[6], (C, C, 3)), "b2": r(ks[7], (C,)),
        "g2": pos(ks[8], (C,)), "be2": r(ks[9], (C,)),
        "m2": r(ks[10], (C,)), "v2": pos(ks[11], (C,)),
        "w3": r(ks[12], (C, C, 1)), "b3": r(ks[13], (C,)),
        "g3": pos(ks[14], (C,)), "be3": r(ks[15], (C,)),
        "m3": r(ks[16], (C,)), "v3": pos(ks[17], (C,)),
    }

    x = jax.random.normal(ks[20], (N, C, L), dtype=jnp.float32)

    out = jax.jit(bottleneck_residual_block3)(x, params)
    out = jax.block_until_ready(out)

    ref = bottleneck_residual_block3_ref(x, params)
    assert out.shape == (N, C, L), out.shape
    assert jnp.allclose(out, ref, atol=1e-4, rtol=1e-4), float(jnp.max(jnp.abs(out - ref)))

    print("KERNEL_OK")
</pallas_src>

<mosaic_0001>
module attributes {stable_mosaic.version = 11 : i64} {
  func.func @bottleneck_kernel(%arg0: i32, %arg1: memref<8x1024xf32, #tpu.memory_space<vmem>>, %arg2: memref<8x8xf32, #tpu.memory_space<vmem>>, %arg3: memref<8x24xf32, #tpu.memory_space<vmem>>, %arg4: memref<8x8xf32, #tpu.memory_space<vmem>>, %arg5: memref<8x3xf32, #tpu.memory_space<vmem>>, %arg6: memref<8x1024xf32, #tpu.memory_space<vmem>>) attributes {dimension_semantics = [#tpu.dimension_semantics<parallel>], iteration_bounds = array<i64: 1>, scalar_prefetch = 0 : i64, scratch_operands = 0 : i64, tpu.core_type = #tpu.core_type<tc>, window_params = [{transform_indices = @transform_0, window_bounds = array<i64: 8, 1024>}, {pipeline_mode = #tpu.pipeline_mode<synchronous>, transform_indices = @transform_1, window_bounds = array<i64: 8, 8>}, {pipeline_mode = #tpu.pipeline_mode<synchronous>, transform_indices = @transform_2, window_bounds = array<i64: 8, 24>}, {pipeline_mode = #tpu.pipeline_mode<synchronous>, transform_indices = @transform_3, window_bounds = array<i64: 8, 8>}, {pipeline_mode = #tpu.pipeline_mode<synchronous>, transform_indices = @transform_4, window_bounds = array<i64: 8, 3>}, {transform_indices = @transform_5, window_bounds = array<i64: 8, 1024>}]} {
    %c0 = arith.constant 0 : index
    %c0_0 = arith.constant 0 : index
    %0 = vector.load %arg1[%c0, %c0_0] : memref<8x1024xf32, #tpu.memory_space<vmem>>, vector<8x1024xf32>
    %c0_1 = arith.constant 0 : index
    %c0_2 = arith.constant 0 : index
    %1 = vector.load %arg2[%c0_1, %c0_2] : memref<8x8xf32, #tpu.memory_space<vmem>>, vector<8x8xf32>
    %c0_3 = arith.constant 0 : index
    %c0_4 = arith.constant 0 : index
    %2 = vector.load %arg3[%c0_3, %c0_4] : memref<8x24xf32, #tpu.memory_space<vmem>>, vector<8x24xf32>
    %c0_5 = arith.constant 0 : index
    %c0_6 = arith.constant 0 : index
    %3 = vector.load %arg4[%c0_5, %c0_6] : memref<8x8xf32, #tpu.memory_space<vmem>>, vector<8x8xf32>
    %c0_7 = arith.constant 0 : index
    %c0_8 = arith.constant 0 : index
    %4 = vector.load %arg5[%c0_7, %c0_8] : memref<8x3xf32, #tpu.memory_space<vmem>>, vector<8x1xf32>
    %c0_9 = arith.constant 0 : index
    %c1 = arith.constant 1 : index
    %5 = vector.load %arg5[%c0_9, %c1] : memref<8x3xf32, #tpu.memory_space<vmem>>, vector<8x1xf32>
    %c0_10 = arith.constant 0 : index
    %c2 = arith.constant 2 : index
    %6 = vector.load %arg5[%c0_10, %c2] : memref<8x3xf32, #tpu.memory_space<vmem>>, vector<8x1xf32>
    %7 = tpu.iota {dimensions = array<i32: 1>} : vector<8x1024xi32>
    %c256_i32 = arith.constant 256 : i32
    %8 = vector.broadcast %c256_i32 : i32 to vector<8x1024xi32>
    %9 = arith.remsi %7, %8 : vector<8x1024xi32>
    %c0_i32 = arith.constant 0 : i32
    %10 = vector.broadcast %c0_i32 : i32 to vector<8x1024xi32>
    %11 = arith.cmpi eq, %9, %10 : vector<8x1024xi32>
    %c255_i32 = arith.constant 255 : i32
    %12 = vector.broadcast %c255_i32 : i32 to vector<8x1024xi32>
    %13 = arith.cmpi eq, %9, %12 : vector<8x1024xi32>
    %cst = arith.constant 0.000000e+00 : f32
    %14 = vector.broadcast %cst : f32 to vector<8x1024xf32>
    %cst_11 = arith.constant dense<0.000000e+00> : vector<8x1024xf32>
    %15 = tpu.matmul %1, %0, %cst_11 {dimension_numbers = #tpu.dot_dimension_numbers<[1], [0], [0], [1], [0, 0, 1, 1], [], []>} : vector<8x8xf32>, vector<8x1024xf32>, vector<8x1024xf32> -> vector<8x1024xf32>
    %16 = vector.broadcast %4 : vector<8x1xf32> to vector<8x1024xf32>
    %17 = arith.addf %15, %16 : vector<8x1024xf32>
    %cst_12 = arith.constant 0.000000e+00 : f32
    %18 = vector.broadcast %cst_12 : f32 to vector<8x1024xf32>
    %19 = arith.maximumf %17, %18 : vector<8x1024xf32>
    %c1_i32 = arith.constant 1 : i32
    %20 = tpu.dynamic_rotate %19 by %c1_i32 dim 1 : vector<8x1024xf32>, i32 -> vector<8x1024xf32>
    %21 = arith.select %11, %14, %20 : vector<8x1024xi1>, vector<8x1024xf32>
    %c1023_i32 = arith.constant 1023 : i32
    %22 = tpu.dynamic_rotate %19 by %c1023_i32 dim 1 : vector<8x1024xf32>, i32 -> vector<8x1024xf32>
    %23 = arith.select %13, %14, %22 : vector<8x1024xi1>, vector<8x1024xf32>
    %24 = tpu.concatenate %21, %19, %23 in 0 : vector<8x1024xf32>, vector<8x1024xf32>, vector<8x1024xf32> -> vector<24x1024xf32>
    %cst_13 = arith.constant dense<0.000000e+00> : vector<8x1024xf32>
    %25 = tpu.matmul %2, %24, %cst_13 {dimension_numbers = #tpu.dot_dimension_numbers<[1], [0], [0], [1], [0, 0, 1, 1], [], []>} : vector<8x24xf32>, vector<24x1024xf32>, vector<8x1024xf32> -> vector<8x1024xf32>
    %26 = vector.broadcast %5 : vector<8x1xf32> to vector<8x1024xf32>
    %27 = arith.addf %25, %26 : vector<8x1024xf32>
    %cst_14 = arith.constant 0.000000e+00 : f32
    %28 = vector.broadcast %cst_14 : f32 to vector<8x1024xf32>
    %29 = arith.maximumf %27, %28 : vector<8x1024xf32>
    %cst_15 = arith.constant dense<0.000000e+00> : vector<8x1024xf32>
    %30 = tpu.matmul %3, %29, %cst_15 {dimension_numbers = #tpu.dot_dimension_numbers<[1], [0], [0], [1], [0, 0, 1, 1], [], []>} : vector<8x8xf32>, vector<8x1024xf32>, vector<8x1024xf32> -> vector<8x1024xf32>
    %31 = vector.broadcast %6 : vector<8x1xf32> to vector<8x1024xf32>
    %32 = arith.addf %30, %31 : vector<8x1024xf32>
    %33 = arith.addf %32, %0 : vector<8x1024xf32>
    %cst_16 = arith.constant 0.000000e+00 : f32
    %34 = vector.broadcast %cst_16 : f32 to vector<8x1024xf32>
    %35 = arith.maximumf %33, %34 : vector<8x1024xf32>
    %c0_17 = arith.constant 0 : index
    %c0_18 = arith.constant 0 : index
    %36 = vector.load %arg6[%c0_17, %c0_18] : memref<8x1024xf32, #tpu.memory_space<vmem>>, vector<8x1024xf32>
    tpu.vector_store %arg6[%c0_17, %c0_18], %35 {strides = array<i32>} : memref<8x1024xf32, #tpu.memory_space<vmem>>, vector<8x1024xf32>,
    return
  }
  func.func @transform_0(%arg0: i32) -> (i32, i32) {
    %c0_i32 = arith.constant 0 : i32
    %c0_i32_0 = arith.constant 0 : i32
    return %c0_i32, %arg0 : i32, i32
  }
  func.func @transform_1(%arg0: i32) -> (i32, i32) {
    %c0_i32 = arith.constant 0 : i32
    %c0_i32_0 = arith.constant 0 : i32
    %c0_i32_1 = arith.constant 0 : i32
    return %c0_i32, %c0_i32_0 : i32, i32
  }
  func.func @transform_2(%arg0: i32) -> (i32, i32) {
    %c0_i32 = arith.constant 0 : i32
    %c0_i32_0 = arith.constant 0 : i32
    %c0_i32_1 = arith.constant 0 : i32
    return %c0_i32, %c0_i32_0 : i32, i32
  }
  func.func @transform_3(%arg0: i32) -> (i32, i32) {
    %c0_i32 = arith.constant 0 : i32
    %c0_i32_0 = arith.constant 0 : i32
    %c0_i32_1 = arith.constant 0 : i32
    return %c0_i32, %c0_i32_0 : i32, i32
  }
  func.func @transform_4(%arg0: i32) -> (i32, i32) {
    %c0_i32 = arith.constant 0 : i32
    %c0_i32_0 = arith.constant 0 : i32
    %c0_i32_1 = arith.constant 0 : i32
    return %c0_i32, %c0_i32_0 : i32, i32
  }
  func.func @transform_5(%arg0: i32) -> (i32, i32) {
    %c0_i32 = arith.constant 0 : i32
    %c0_i32_0 = arith.constant 0 : i32
    return %c0_i32, %arg0 : i32, i32
  }
}

</mosaic_0001>

<llo_original>
// kernel: bottleneck_residual_block3.1
$region0: #{bottleneck_residual_block3.1}
  #allocation0 [shape = 'u32[]', space=smem, size = 0x4, offset = 0x4, fixed_abs, tag = 'smem constant byte address 0x4 - core index']
  #allocation1 [shape = 'u32[144,128]{1,0:T(1,128)}', space=vmem, size = 0x12000, scoped, tag = 'internal scratch']
  %s0 = inlined_call_operand.vmem [shape: f32[8,1024], index: 0, kind: input, shape index: {}]
  %s1 = inlined_call_operand.vmem [shape: f32[8,8], index: 1, kind: input, shape index: {}]
  %s2 = inlined_call_operand.vmem [shape: f32[8,24], index: 2, kind: input, shape index: {}]
  %s3 = inlined_call_operand.vmem [shape: f32[8,8], index: 3, kind: input, shape index: {}]
  %s4 = inlined_call_operand.vmem [shape: f32[8,3], index: 4, kind: input, shape index: {}]
  %s5 = inlined_call_operand.hbm [shape: f32[8,1024], index: 5, kind: output, shape index: {}]
  %s6 = sld [smem:[#allocation0]]
  $region30: #{bottleneck_residual_block3.1} parent=0
    _
  %s8 = ssub.s32 1, %s6
  %s9 = scalar_select 0, %s8, %s6
  $region1: #{bottleneck_residual_block3.1} parent=0
    #allocation2 [shape = 'u8[32768]{0}', space=vmem, size = 0x8000, scoped, tag = 'output window, operand 0, single buffered']
    #allocation3 [shape = 's32[1]{0}', space=sflag, size = 0x4, scoped, tag = 'scoped memory for bottleneck_residual_block3.1']
    %10 = vsyncpa [#allocation3], 0
    // Predicated region
    $region2: #{bottleneck_residual_block3.1} parent=1 // pred_check
      _
    $region3: #{bottleneck_residual_block3.1} parent=1 // pred_check_branch
      %12 = sbr.rel (0) target = $region5
    $region4: #{bottleneck_residual_block3.1} parent=1 // pred_region
      _
    $region5: #{bottleneck_residual_block3.1} parent=1 // pred_fallthru
      _
    // Predicated region
    $region6: #{bottleneck_residual_block3.1} parent=1 // pred_check
      _
    $region7: #{bottleneck_residual_block3.1} parent=1 // pred_check_branch
      %14 = sbr.rel (0) target = $region9
    $region8: #{bottleneck_residual_block3.1} parent=1 // pred_region
      _
    $region9: #{bottleneck_residual_block3.1} parent=1 // pred_fallthru
      _
    // Predicated region
    $region10: #{bottleneck_residual_block3.1} parent=1 // pred_check
      _
    $region11: #{bottleneck_residual_block3.1} parent=1 // pred_check_branch
      %16 = sbr.rel (0) target = $region13
    $region12: #{bottleneck_residual_block3.1} parent=1 // pred_region
      _
    $region13: #{bottleneck_residual_block3.1} parent=1 // pred_fallthru
      _
    // Predicated region
    $region14: #{bottleneck_residual_block3.1} parent=1 // pred_check
      _
    $region15: #{bottleneck_residual_block3.1} parent=1 // pred_check_branch
      %18 = sbr.rel (0) target = $region17
    $region16: #{bottleneck_residual_block3.1} parent=1 // pred_region
      _
    $region17: #{bottleneck_residual_block3.1} parent=1 // pred_fallthru
      _
    // Predicated region
    $region18: #{bottleneck_residual_block3.1} parent=1 // pred_check
      _
    $region19: #{bottleneck_residual_block3.1} parent=1 // pred_check_branch
      %20 = sbr.rel (0) target = $region21
    $region20: #{bottleneck_residual_block3.1} parent=1 // pred_region
      _
    $region21: #{bottleneck_residual_block3.1} parent=1 // pred_fallthru
      _
    %v21 = vld [vmem:[%s0] sm:$0xff]
    %v22 = vld [vmem:[%s0 + $0x8] sm:$0xff]
    %v23 = vld [vmem:[%s0 + $0x10] sm:$0xff]
    %v24 = vld [vmem:[%s0 + $0x18] sm:$0xff]
    %v25 = vld [vmem:[%s0 + $0x20] sm:$0xff]
    %v26 = vld [vmem:[%s0 + $0x28] sm:$0xff]
    %v27 = vld [vmem:[%s0 + $0x30] sm:$0xff]
    %v28 = vld [vmem:[%s0 + $0x38] sm:$0xff]
    %v29 = vld [vmem:[%s1] sm:$0xff]
    %v30 = vld [vmem:[%s2] sm:$0xff]
    %v31 = vld [vmem:[%s3] sm:$0xff]
    %v32 = vld [vmem:[%s4] sm:$0xff]
    %v33 = vlaneseq
    %v34 = vand.u32 %v33, 127
    %v35 = vadd.s32 %v34, 128
    %v36 = vadd.s32 %v34, 256
    %v37 = vadd.s32 %v34, 384
    %v38 = vadd.s32 %v34, 512
    %v39 = vadd.s32 %v34, 640
    %v40 = vadd.s32 %v34, 768
    %v41 = vadd.s32 %v34, 896
    %vm42 = vcmp.lt.s32.totalorder %v34, 0
    %v43 = vsub.s32 0, %v34
    %v44 = vsel %vm42, %v43, %v34
    %v45 = vshrl.u32 %v44, 8
    %v46 = vand.u32 %v44, 255
    %v47 = vsub.s32 0, %v46
    %v48 = vsel %vm42, %v47, %v46
    %vm49 = vcmp.lt.s32.totalorder %v35, 0
    %v50 = vsub.s32 0, %v35
    %v51 = vsel %vm49, %v50, %v35
    %v52 = vshrl.u32 %v51, 8
    %v53 = vand.u32 %v51, 255
    %v54 = vsub.s32 0, %v53
    %v55 = vsel %vm49, %v54, %v53
    %vm56 = vcmp.lt.s32.totalorder %v36, 0
    %v57 = vsub.s32 0, %v36
    %v58 = vsel %vm56, %v57, %v36
    %v59 = vshrl.u32 %v58, 8
    %v60 = vand.u32 %v58, 255
    %v61 = vsub.s32 0, %v60
    %v62 = vsel %vm56, %v61, %v60
    %vm63 = vcmp.lt.s32.totalorder %v37, 0
    %v64 = vsub.s32 0, %v37
    %v65 = vsel %vm63, %v64, %v37
    %v66 = vshrl.u32 %v65, 8
    %v67 = vand.u32 %v65, 255
    %v68 = vsub.s32 0, %v67
    %v69 = vsel %vm63, %v68, %v67
    %vm70 = vcmp.lt.s32.totalorder %v38, 0
    %v71 = vsub.s32 0, %v38
    %v72 = vsel %vm70, %v71, %v38
    %v73 = vshrl.u32 %v72, 8
    %v74 = vand.u32 %v72, 255
    %v75 = vsub.s32 0, %v74
    %v76 = vsel %vm70, %v75, %v74
    %vm77 = vcmp.lt.s32.totalorder %v39, 0
    %v78 = vsub.s32 0, %v39
    %v79 = vsel %vm77, %v78, %v39
    %v80 = vshrl.u32 %v79, 8
    %v81 = vand.u32 %v79, 255
    %v82 = vsub.s32 0, %v81
    %v83 = vsel %vm77, %v82, %v81
    %vm84 = vcmp.lt.s32.totalorder %v40, 0
    %v85 = vsub.s32 0, %v40
    %v86 = vsel %vm84, %v85, %v40
    %v87 = vshrl.u32 %v86, 8
    %v88 = vand.u32 %v86, 255
    %v89 = vsub.s32 0, %v88
    %v90 = vsel %vm84, %v89, %v88
    %vm91 = vcmp.lt.s32.totalorder %v41, 0
    %v92 = vsub.s32 0, %v41
    %v93 = vsel %vm91, %v92, %v41
    %v94 = vshrl.u32 %v93, 8
    %v95 = vand.u32 %v93, 255
    %v96 = vsub.s32 0, %v95
    %v97 = vsel %vm91, %v96, %v95
    %vm98 = vcmp.eq.s32.totalorder %v48, 0
    %vm99 = vcmp.eq.s32.totalorder %v55, 0
    %vm100 = vcmp.eq.s32.totalorder %v62, 0
    %vm101 = vcmp.eq.s32.totalorder %v69, 0
    %vm102 = vcmp.eq.s32.totalorder %v76, 0
    %vm103 = vcmp.eq.s32.totalorder %v83, 0
    %vm104 = vcmp.eq.s32.totalorder %v90, 0
    %vm105 = vcmp.eq.s32.totalorder %v97, 0
    %vm106 = vcmp.eq.s32.totalorder %v48, 255
    %vm107 = vcmp.eq.s32.totalorder %v55, 255
    %vm108 = vcmp.eq.s32.totalorder %v62, 255
    %vm109 = vcmp.eq.s32.totalorder %v69, 255
    %vm110 = vcmp.eq.s32.totalorder %v76, 255
    %vm111 = vcmp.eq.s32.totalorder %v83, 255
    %vm112 = vcmp.eq.s32.totalorder %v90, 255
    %vm113 = vcmp.eq.s32.totalorder %v97, 255
    %115 = vset.pattern.permute.xlu0 0
    %116 = vperm.xlu0 %115, %v32
    %v117 = vpop.permute.xlu0 %116
    %vm119 = vcmask 64512
    %v121 = vsel %vm119, %v29, 0
    %123 = vmatprep.subr.mxu0 %v22
    %124 = vmatpush1.msra.mxu0 %v21
    %125 = vmatprep.subr.mxu0 0.0
    %126 = vmatpush1.msra.mxu0 0.0
    %127 = vmatprep.subr.mxu0 0.0
    %128 = vmatpush1.msra.mxu0 0.0
    %129 = vmatprep.subr.mxu0 0.0
    %130 = vmatpush1.msra.mxu0 0.0
    %131 = vmatprep.subr.mxu0 0.0
    %132 = vmatpush1.msra.mxu0 0.0
    %133 = vmatprep.subr.mxu0 0.0
    %134 = vmatpush1.msra.mxu0 0.0
    %135 = vmatprep.subr.mxu0 0.0
    %136 = vmatpush1.msra.mxu0 0.0
    %137 = vmatprep.subr.mxu0 0.0
    %138 = vmatpush1.msra.mxu0 0.0
    %139 = vmatprep.subr.mxu0 0.0
    %140 = vmatpush1.msra.mxu0 0.0
    %141 = vmatprep.subr.mxu0 0.0
    %142 = vmatpush1.msra.mxu0 0.0
    %143 = vmatprep.subr.mxu0 0.0
    %144 = vmatpush1.msra.mxu0 0.0
    %145 = vmatprep.subr.mxu0 0.0
    %146 = vmatpush1.msra.mxu0 0.0
    %147 = vmatprep.subr.mxu0 0.0
    %148 = vmatpush1.msra.mxu0 0.0
    %149 = vmatprep.subr.mxu0 0.0
    %150 = vmatpush1.msra.mxu0 0.0
    %151 = vmatprep.subr.mxu0 0.0
    %152 = vmatpush1.msra.mxu0 0.0
    %153 = vmatprep.subr.mxu0 0.0
    %154 = vmatpush1.msra.mxu0 0.0
    %155 = vmatprep.subr.mxu0 0.0
    %156 = vmatpush1.msra.mxu0 0.0
    %157 = vmatprep.subr.mxu0 0.0
    %158 = vmatpush1.msra.mxu0 0.0
    %159 = vmatprep.subr.mxu0 0.0
    %160 = vmatpush1.msra.mxu0 0.0
    %161 = vmatprep.subr.mxu0 0.0
    %162 = vmatpush1.msra.mxu0 0.0
    %163 = vmatprep.subr.mxu0 0.0
    %164 = vmatpush1.msra.mxu0 0.0
    %165 = vmatprep.subr.mxu0 0.0
    %166 = vmatpush1.msra.mxu0 0.0
    %167 = vmatprep.subr.mxu0 0.0
    %168 = vmatpush1.msra.mxu0 0.0
    %169 = vmatprep.subr.mxu0 0.0
    %170 = vmatpush1.msra.mxu0 0.0
    %171 = vmatprep.subr.mxu0 0.0
    %172 = vmatpush1.msra.mxu0 0.0
    %173 = vmatprep.subr.mxu0 0.0
    %174 = vmatpush1.msra.mxu0 0.0
    %175 = vmatprep.subr.mxu0 0.0
    %176 = vmatpush1.msra.mxu0 0.0
    %177 = vmatprep.subr.mxu0 0.0
    %178 = vmatpush1.msra.mxu0 0.0
    %179 = vmatprep.subr.mxu0 0.0
    %180 = vmatpush1.msra.mxu0 0.0
    %181 = vmatprep.subr.mxu0 0.0
    %182 = vmatpush1.msra.mxu0 0.0
    %183 = vmatprep.subr.mxu0 0.0
    %184 = vmatpush1.msra.mxu0 0.0
    %185 = vmatprep.subr.mxu0 0.0
    %186 = vmatpush1.msra.mxu0 0.0
    %187 = vmatprep.mubr.f32.mxu0 0.0
    %188 = vmatmul.mubr.f32.gmra.mrb[0].mxu0 %v121
    %v189 = vpop.f32.mrb[0].mxu0
    %v190 = vadd.f32 %v117, %v189
    %v191 = vpop.f32.mrb[0].mxu0
    %v192 = vadd.f32 %v117, %v191
    %193 = vdwg.mxu0
    %194 = vmatprep.subr.mxu0 %v24
    %195 = vmatpush1.msra.mxu0 %v23
    %196 = vmatprep.subr.mxu0 0.0
    %197 = vmatpush1.msra.mxu0 0.0
    %198 = vmatprep.subr.mxu0 0.0
    %199 = vmatpush1.msra.mxu0 0.0
    %200 = vmatprep.subr.mxu0 0.0
    %201 = vmatpush1.msra.mxu0 0.0
    %202 = vmatprep.subr.mxu0 0.0
    %203 = vmatpush1.msra.mxu0 0.0
    %204 = vmatprep.subr.mxu0 0.0
    %205 = vmatpush1.msra.mxu0 0.0
    %206 = vmatprep.subr.mxu0 0.0
    %207 = vmatpush1.msra.mxu0 0.0
    %208 = vmatprep.subr.mxu0 0.0
    %209 = vmatpush1.msra.mxu0 0.0
    %210 = vmatprep.subr.mxu0 0.0
    %211 = vmatpush1.msra.mxu0 0.0
    %212 = vmatprep.subr.mxu0 0.0
    %213 = vmatpush1.msra.mxu0 0.0
    %214 = vmatprep.subr.mxu0 0.0
    %215 = vmatpush1.msra.mxu0 0.0
    %216 = vmatprep.subr.mxu0 0.0
    %217 = vmatpush1.msra.mxu0 0.0
    %218 = vmatprep.subr.mxu0 0.0
    %219 = vmatpush1.msra.mxu0 0.0
    %220 = vmatprep.subr.mxu0 0.0
    %221 = vmatpush1.msra.mxu0 0.0
    %222 = vmatprep.subr.mxu0 0.0
    %223 = vmatpush1.msra.mxu0 0.0
    %224 = vmatprep.subr.mxu0 0.0
    %225 = vmatpush1.msra.mxu0 0.0
    %226 = vmatprep.subr.mxu0 0.0
    %227 = vmatpush1.msra.mxu0 0.0
    %228 = vmatprep.subr.mxu0 0.0
    %229 = vmatpush1.msra.mxu0 0.0
    %230 = vmatprep.subr.mxu0 0.0
    %231 = vmatpush1.msra.mxu0 0.0
    %232 = vmatprep.subr.mxu0 0.0
    %233 = vmatpush1.msra.mxu0 0.0
    %234 = vmatprep.subr.mxu0 0.0
    %235 = vmatpush1.msra.mxu0 0.0
    %236 = vmatprep.subr.mxu0 0.0
    %237 = vmatpush1.msra.mxu0 0.0
    %238 = vmatprep.subr.mxu0 0.0
    %239 = vmatpush1.msra.mxu0 0.0
    %240 = vmatprep.subr.mxu0 0.0
    %241 = vmatpush1.msra.mxu0 0.0
    %242 = vmatprep.subr.mxu0 0.0
    %243 = vmatpush1.msra.mxu0 0.0
    %244 = vmatprep.subr.mxu0 0.0
    %245 = vmatpush1.msra.mxu0 0.0
    %246 = vmatprep.subr.mxu0 0.0
    %247 = vmatpush1.msra.mxu0 0.0
    %248 = vmatprep.subr.mxu0 0.0
    %249 = vmatpush1.msra.mxu0 0.0
    %250 = vmatprep.subr.mxu0 0.0
    %251 = vmatpush1.msra.mxu0 0.0
    %252 = vmatprep.subr.mxu0 0.0
    %253 = vmatpush1.msra.mxu0 0.0
    %254 = vmatprep.subr.mxu0 0.0
    %255 = vmatpush1.msra.mxu0 0.0
    %256 = vmatprep.subr.mxu0 0.0
    %257 = vmatpush1.msra.mxu0 0.0
    %258 = vmatprep.mubr.f32.mxu0 0.0
    %259 = vmatmul.mubr.f32.gmra.mrb[0].mxu0 %v121
    %v260 = vpop.f32.mrb[0].mxu0
    %v261 = vadd.f32 %v117, %v260
    %v262 = vpop.f32.mrb[0].mxu0
    %v263 = vadd.f32 %v117, %v262
    %264 = vdwg.mxu0
    %265 = vmatprep.subr.mxu0 %v26
    %266 = vmatpush1.msra.mxu0 %v25
    %267 = vmatprep.subr.mxu0 0.0
    %268 = vmatpush1.msra.mxu0 0.0
    %269 = vmatprep.subr.mxu0 0.0
    %270 = vmatpush1.msra.mxu0 0.0
    %271 = vmatprep.subr.mxu0 0.0
    %272 = vmatpush1.msra.mxu0 0.0
    %273 = vmatprep.subr.mxu0 0.0
    %274 = vmatpush1.msra.mxu0 0.0
    %275 = vmatprep.subr.mxu0 0.0
    %276 = vmatpush1.msra.mxu0 0.0
    %277 = vmatprep.subr.mxu0 0.0
    %278 = vmatpush1.msra.mxu0 0.0
    %279 = vmatprep.subr.mxu0 0.0
    %280 = vmatpush1.msra.mxu0 0.0
    %281 = vmatprep.subr.mxu0 0.0
    %282 = vmatpush1.msra.mxu0 0.0
    %283 = vmatprep.subr.mxu0 0.0
    %284 = vmatpush1.msra.mxu0 0.0
    %285 = vmatprep.subr.mxu0 0.0
    %286 = vmatpush1.msra.mxu0 0.0
    %287 = vmatprep.subr.mxu0 0.0
    %288 = vmatpush1.msra.mxu0 0.0
    %289 = vmatprep.subr.mxu0 0.0
    %290 = vmatpush1.msra.mxu0 0.0
    %291 = vmatprep.subr.mxu0 0.0
    %292 = vmatpush1.msra.mxu0 0.0
    %293 = vmatprep.subr.mxu0 0.0
    %294 = vmatpush1.msra.mxu0 0.0
    %295 = vmatprep.subr.mxu0 0.0
    %296 = vmatpush1.msra.mxu0 0.0
    %297 = vmatprep.subr.mxu0 0.0
    %298 = vmatpush1.msra.mxu0 0.0
    %299 = vmatprep.subr.mxu0 0.0
    %300 = vmatpush1.msra.mxu0 0.0
    %301 = vmatprep.subr.mxu0 0.0
    %302 = vmatpush1.msra.mxu0 0.0
    %303 = vmatprep.subr.mxu0 0.0
    %304 = vmatpush1.msra.mxu0 0.0
    %305 = vmatprep.subr.mxu0 0.0
    %306 = vmatpush1.msra.mxu0 0.0
    %307 = vmatprep.subr.mxu0 0.0
    %308 = vmatpush1.msra.mxu0 0.0
    %309 = vmatprep.subr.mxu0 0.0
    %310 = vmatpush1.msra.mxu0 0.0
    %311 = vmatprep.subr.mxu0 0.0
    %312 = vmatpush1.msra.mxu0 0.0
    %313 = vmatprep.subr.mxu0 0.0
    %314 = vmatpush1.msra.mxu0 0.0
    %315 = vmatprep.subr.mxu0 0.0
    %316 = vmatpush1.msra.mxu0 0.0
    %317 = vmatprep.subr.mxu0 0.0
    %318 = vmatpush1.msra.mxu0 0.0
    %319 = vmatprep.subr.mxu0 0.0
    %320 = vmatpush1.msra.mxu0 0.0
    %321 = vmatprep.subr.mxu0 0.0
    %322 = vmatpush1.msra.mxu0 0.0
    %323 = vmatprep.subr.mxu0 0.0
    %324 = vmatpush1.msra.mxu0 0.0
    %325 = vmatprep.subr.mxu0 0.0
    %326 = vmatpush1.msra.mxu0 0.0
    %327 = vmatprep.subr.mxu0 0.0
    %328 = vmatpush1.msra.mxu0 0.0
    %329 = vmatprep.mubr.f32.mxu0 0.0
    %330 = vmatmul.mubr.f32.gmra.mrb[0].mxu0 %v121
    %v331 = vpop.f32.mrb[0].mxu0
    %v332 = vadd.f32 %v117, %v331
    %v333 = vpop.f32.mrb[0].mxu0
    %v334 = vadd.f32 %v117, %v333
    %335 = vdwg.mxu0
    %336 = vmatprep.subr.mxu0 %v28
    %337 = vmatpush1.msra.mxu0 %v27
    %338 = vmatprep.subr.mxu0 0.0
    %339 = vmatpush1.msra.mxu0 0.0
    %340 = vmatprep.subr.mxu0 0.0
    %341 = vmatpush1.msra.mxu0 0.0
    %342 = vmatprep.subr.mxu0 0.0
    %343 = vmatpush1.msra.mxu0 0.0
    %344 = vmatprep.subr.mxu0 0.0
    %345 = vmatpush1.msra.mxu0 0.0
    %346 = vmatprep.subr.mxu0 0.0
    %347 = vmatpush1.msra.mxu0 0.0
    %348 = vmatprep.subr.mxu0 0.0
    %349 = vmatpush1.msra.mxu0 0.0
    %350 = vmatprep.subr.mxu0 0.0
    %351 = vmatpush1.msra.mxu0 0.0
    %352 = vmatprep.subr.mxu0 0.0
    %353 = vmatpush1.msra.mxu0 0.0
    %354 = vmatprep.subr.mxu0 0.0
    %355 = vmatpush1.msra.mxu0 0.0
    %356 = vmatprep.subr.mxu0 0.0
    %357 = vmatpush1.msra.mxu0 0.0
    %358 = vmatprep.subr.mxu0 0.0
    %359 = vmatpush1.msra.mxu0 0.0
    %360 = vmatprep.subr.mxu0 0.0
    %361 = vmatpush1.msra.mxu0 0.0
    %362 = vmatprep.subr.mxu0 0.0
    %363 = vmatpush1.msra.mxu0 0.0
    %364 = vmatprep.subr.mxu0 0.0
    %365 = vmatpush1.msra.mxu0 0.0
    %366 = vmatprep.subr.mxu0 0.0
    %367 = vmatpush1.msra.mxu0 0.0
    %368 = vmatprep.subr.mxu0 0.0
    %369 = vmatpush1.msra.mxu0 0.0
    %370 = vmatprep.subr.mxu0 0.0
    %371 = vmatpush1.msra.mxu0 0.0
    %372 = vmatprep.subr.mxu0 0.0
    %373 = vmatpush1.msra.mxu0 0.0
    %374 = vmatprep.subr.mxu0 0.0
    %375 = vmatpush1.msra.mxu0 0.0
    %376 = vmatprep.subr.mxu0 0.0
    %377 = vmatpush1.msra.mxu0 0.0
    %378 = vmatprep.subr.mxu0 0.0
    %379 = vmatpush1.msra.mxu0 0.0
    %380 = vmatprep.subr.mxu0 0.0
    %381 = vmatpush1.msra.mxu0 0.0
    %382 = vmatprep.subr.mxu0 0.0
    %383 = vmatpush1.msra.mxu0 0.0
    %384 = vmatprep.subr.mxu0 0.0
    %385 = vmatpush1.msra.mxu0 0.0
    %386 = vmatprep.subr.mxu0 0.0
    %387 = vmatpush1.msra.mxu0 0.0
    %388 = vmatprep.subr.mxu0 0.0
    %389 = vmatpush1.msra.mxu0 0.0
    %390 = vmatprep.subr.mxu0 0.0
    %391 = vmatpush1.msra.mxu0 0.0
    %392 = vmatprep.subr.mxu0 0.0
    %393 = vmatpush1.msra.mxu0 0.0
    %394 = vmatprep.subr.mxu0 0.0
    %395 = vmatpush1.msra.mxu0 0.0
    %396 = vmatprep.subr.mxu0 0.0
    %397 = vmatpush1.msra.mxu0 0.0
    %398 = vmatprep.subr.mxu0 0.0
    %399 = vmatpush1.msra.mxu0 0.0
    %400 = vmatprep.mubr.f32.mxu0 0.0
    %401 = vmatmul.mubr.f32.gmra.mrb[0].mxu0 %v121
    %v402 = vpop.f32.mrb[0].mxu0
    %v403 = vadd.f32 %v117, %v402
    %v404 = vpop.f32.mrb[0].mxu0
    %v405 = vadd.f32 %v117, %v404
    %406 = vdwg.mxu0
    %v407 = vmax.f32 %v190, 0.0
    %v408 = vmax.f32 %v192, 0.0
    %v409 = vmax.f32 %v261, 0.0
    %v410 = vmax.f32 %v263, 0.0
    %v411 = vmax.f32 %v332, 0.0
    %v412 = vmax.f32 %v334, 0.0
    %v413 = vmax.f32 %v403, 0.0
    %v414 = vmax.f32 %v405, 0.0
    %415 = vrot.lane.b32.xlu0 %v407, 1
    %v416 = vpop.permute.xlu0 %415
    %417 = vrot.lane.b32.xlu0 %v408, 1
    %v418 = vpop.permute.xlu0 %417
    %419 = vrot.lane.b32.xlu0 %v409, 1
    %v420 = vpop.permute.xlu0 %419
    %421 = vrot.lane.b32.xlu0 %v410, 1
    %v422 = vpop.permute.xlu0 %421
    %423 = vrot.lane.b32.xlu0 %v411, 1
    %v424 = vpop.permute.xlu0 %423
    %425 = vrot.lane.b32.xlu0 %v412, 1
    %v426 = vpop.permute.xlu0 %425
    %427 = vrot.lane.b32.xlu0 %v413, 1
    %v428 = vpop.permute.xlu0 %427
    %429 = vrot.lane.b32.xlu0 %v414, 1
    %v430 = vpop.permute.xlu0 %429
    %vm431 = vcmp.lt.s32.totalorder %v34, 1
    %v432 = vsel %vm431, %v428, %v430
    %v433 = vsel %vm431, %v426, %v428
    %v434 = vsel %vm431, %v424, %v426
    %v435 = vsel %vm431, %v422, %v424
    %v436 = vsel %vm431, %v420, %v422
    %v437 = vsel %vm431, %v418, %v420
    %v438 = vsel %vm431, %v416, %v418
    %v439 = vsel %vm431, %v430, %v416
    %v440 = vsel %vm98, 0.0, %v439
    %v441 = vsel %vm99, 0.0, %v438
    %v442 = vsel %vm100, 0.0, %v437
    %v443 = vsel %vm101, 0.0, %v436
    %v444 = vsel %vm102, 0.0, %v435
    %v445 = vsel %vm103, 0.0, %v434
    %v446 = vsel %vm104, 0.0, %v433
    %v447 = vsel %vm105, 0.0, %v432
    %448 = vrot.lane.b32.xlu0 %v407, 127
    %v449 = vpop.permute.xlu0 %448
    %450 = vrot.lane.b32.xlu0 %v408, 127
    %v451 = vpop.permute.xlu0 %450
    %452 = vrot.lane.b32.xlu0 %v409, 127
    %v453 = vpop.permute.xlu0 %452
    %454 = vrot.lane.b32.xlu0 %v410, 127
    %v455 = vpop.permute.xlu0 %454
    %456 = vrot.lane.b32.xlu0 %v411, 127
    %v457 = vpop.permute.xlu0 %456
    %458 = vrot.lane.b32.xlu0 %v412, 127
    %v459 = vpop.permute.xlu0 %458
    %460 = vrot.lane.b32.xlu0 %v413, 127
    %v461 = vpop.permute.xlu0 %460
    %462 = vrot.lane.b32.xlu0 %v414, 127
    %v463 = vpop.permute.xlu0 %462
    %vm464 = vcmp.lt.s32.totalorder %v34, 127
    %v465 = vsel %vm464, %v461, %v463
    %v466 = vsel %vm464, %v459, %v461
    %v467 = vsel %vm464, %v457, %v459
    %v468 = vsel %vm464, %v455, %v457
    %v469 = vsel %vm464, %v453, %v455
    %v470 = vsel %vm464, %v451, %v453
    %v471 = vsel %vm464, %v449, %v451
    %v472 = vsel %vm464, %v463, %v449
    %v473 = vsel %vm106, 0.0, %v471
    %v474 = vsel %vm107, 0.0, %v470
    %v475 = vsel %vm108, 0.0, %v469
    %v476 = vsel %vm109, 0.0, %v468
    %v477 = vsel %vm110, 0.0, %v467
    %v478 = vsel %vm111, 0.0, %v466
    %v479 = vsel %vm112, 0.0, %v465
    %v480 = vsel %vm113, 0.0, %v472
    %481 = vset.pattern.permute.xlu0 1
    %482 = vperm.xlu0 %481, %v32
    %v483 = vpop.permute.xlu0 %482
    %vm485 = vcmask 195584
    %v487 = vsel %vm485, %v30, 0
    %489 = vmatprep.subr.mxu0 %v441
    %490 = vmatpush1.msra.mxu0 %v440
    %491 = vmatprep.subr.mxu0 %v408
    %492 = vmatpush1.msra.mxu0 %v407
    %493 = vmatprep.subr.mxu0 %v474
    %494 = vmatpush1.msra.mxu0 %v473
    %495 = vmatprep.subr.mxu0 0.0
    %496 = vmatpush1.msra.mxu0 0.0
    %497 = vmatprep.subr.mxu0 0.0
    %498 = vmatpush1.msra.mxu0 0.0
    %499 = vmatprep.subr.mxu0 0.0
    %500 = vmatpush1.msra.mxu0 0.0
    %501 = vmatprep.subr.mxu0 0.0
    %502 = vmatpush1.msra.mxu0 0.0
    %503 = vmatprep.subr.mxu0 0.0
    %504 = vmatpush1.msra.mxu0 0.0
    %505 = vmatprep.subr.mxu0 0.0
    %506 = vmatpush1.msra.mxu0 0.0
    %507 = vmatprep.subr.mxu0 0.0
    %508 = vmatpush1.msra.mxu0 0.0
    %509 = vmatprep.subr.mxu0 0.0
    %510 = vmatpush1.msra.mxu0 0.0
    %511 = vmatprep.subr.mxu0 0.0
    %512 = vmatpush1.msra.mxu0 0.0
    %513 = vmatprep.subr.mxu0 0.0
    %514 = vmatpush1.msra.mxu0 0.0
    %515 = vmatprep.subr.mxu0 0.0
    %516 = vmatpush1.msra.mxu0 0.0
    %517 = vmatprep.subr.mxu0 0.0
    %518 = vmatpush1.msra.mxu0 0.0
    %519 = vmatprep.subr.mxu0 0.0
    %520 = vmatpush1.msra.mxu0 0.0
    %521 = vmatprep.subr.mxu0 0.0
    %522 = vmatpush1.msra.mxu0 0.0
    %523 = vmatprep.subr.mxu0 0.0
    %524 = vmatpush1.msra.mxu0 0.0
    %525 = vmatprep.subr.mxu0 0.0
    %526 = vmatpush1.msra.mxu0 0.0
    %527 = vmatprep.subr.mxu0 0.0
    %528 = vmatpush1.msra.mxu0 0.0
    %529 = vmatprep.subr.mxu0 0.0
    %530 = vmatpush1.msra.mxu0 0.0
    %531 = vmatprep.subr.mxu0 0.0
    %532 = vmatpush1.msra.mxu0 0.0
    %533 = vmatprep.subr.mxu0 0.0
    %534 = vmatpush1.msra.mxu0 0.0
    %535 = vmatprep.subr.mxu0 0.0
    %536 = vmatpush1.msra.mxu0 0.0
    %537 = vmatprep.subr.mxu0 0.0
    %538 = vmatpush1.msra.mxu0 0.0
    %539 = vmatprep.subr.mxu0 0.0
    %540 = vmatpush1.msra.mxu0 0.0
    %541 = vmatprep.subr.mxu0 0.0
    %542 = vmatpush1.msra.mxu0 0.0
    %543 = vmatprep.subr.mxu0 0.0
    %544 = vmatpush1.msra.mxu0 0.0
    %545 = vmatprep.subr.mxu0 0.0
    %546 = vmatpush1.msra.mxu0 0.0
    %547 = vmatprep.subr.mxu0 0.0
    %548 = vmatpush1.msra.mxu0 0.0
    %549 = vmatprep.subr.mxu0 0.0
    %550 = vmatpush1.msra.mxu0 0.0
    %551 = vmatprep.subr.mxu0 0.0
    %552 = vmatpush1.msra.mxu0 0.0
    %553 = vmatprep.mubr.f32.mxu0 0.0
    %554 = vmatmul.mubr.f32.gmra.mrb[0].mxu0 %v487
    %v555 = vpop.f32.mrb[0].mxu0
    %v556 = vadd.f32 %v483, %v555
    %v557 = vpop.f32.mrb[0].mxu0
    %v558 = vadd.f32 %v483, %v557
    %559 = vdwg.mxu0
    %560 = vmatprep.subr.mxu0 %v443
    %561 = vmatpush1.msra.mxu0 %v442
    %562 = vmatprep.subr.mxu0 %v410
    %563 = vmatpush1.msra.mxu0 %v409
    %564 = vmatprep.subr.mxu0 %v476
    %565 = vmatpush1.msra.mxu0 %v475
    %566 = vmatprep.subr.mxu0 0.0
    %567 = vmatpush1.msra.mxu0 0.0
    %568 = vmatprep.subr.mxu0 0.0
    %569 = vmatpush1.msra.mxu0 0.0
    %570 = vmatprep.subr.mxu0 0.0
    %571 = vmatpush1.msra.mxu0 0.0
    %572 = vmatprep.subr.mxu0 0.0
    %573 = vmatpush1.msra.mxu0 0.0
    %574 = vmatprep.subr.mxu0 0.0
    %575 = vmatpush1.msra.mxu0 0.0
    %576 = vmatprep.subr.mxu0 0.0
    %577 = vmatpush1.msra.mxu0 0.0
    %578 = vmatprep.subr.mxu0 0.0
    %579 = vmatpush1.msra.mxu0 0.0
    %580 = vmatprep.subr.mxu0 0.0
    %581 = vmatpush1.msra.mxu0 0.0
    %582 = vmatprep.subr.mxu0 0.0
    %583 = vmatpush1.msra.mxu0 0.0
    %584 = vmatprep.subr.mxu0 0.0
    %585 = vmatpush1.msra.mxu0 0.0
    %586 = vmatprep.subr.mxu0 0.0
    %587 = vmatpush1.msra.mxu0 0.0
    %588 = vmatprep.subr.mxu0 0.0
    %589 = vmatpush1.msra.mxu0 0.0
    %590 = vmatprep.subr.mxu0 0.0
    %591 = vmatpush1.msra.mxu0 0.0
    %592 = vmatprep.subr.mxu0 0.0
    %593 = vmatpush1.msra.mxu0 0.0
    %594 = vmatprep.subr.mxu0 0.0
    %595 = vmatpush1.msra.mxu0 0.0
    %596 = vmatprep.subr.mxu0 0.0
    %597 = vmatpush1.msra.mxu0 0.0
    %598 = vmatprep.subr.mxu0 0.0
    %599 = vmatpush1.msra.mxu0 0.0
    %600 = vmatprep.subr.mxu0 0.0
    %601 = vmatpush1.msra.mxu0 0.0
    %602 = vmatprep.subr.mxu0 0.0
    %603 = vmatpush1.msra.mxu0 0.0
    %604 = vmatprep.subr.mxu0 0.0
    %605 = vmatpush1.msra.mxu0 0.0
    %606 = vmatprep.subr.mxu0 0.0
    %607 = vmatpush1.msra.mxu0 0.0
    %608 = vmatprep.subr.mxu0 0.0
    %609 = vmatpush1.msra.mxu0 0.0
    %610 = vmatprep.subr.mxu0 0.0
    %611 = vmatpush1.msra.mxu0 0.0
    %612 = vmatprep.subr.mxu0 0.0
    %613 = vmatpush1.msra.mxu0 0.0
    %614 = vmatprep.subr.mxu0 0.0
    %615 = vmatpush1.msra.mxu0 0.0
    %616 = vmatprep.subr.mxu0 0.0
    %617 = vmatpush1.msra.mxu0 0.0
    %618 = vmatprep.subr.mxu0 0.0
    %619 = vmatpush1.msra.mxu0 0.0
    %620 = vmatprep.subr.mxu0 0.0
    %621 = vmatpush1.msra.mxu0 0.0
    %622 = vmatprep.subr.mxu0 0.0
    %623 = vmatpush1.msra.mxu0 0.0
    %624 = vmatprep.mubr.f32.mxu0 0.0
    %625 = vmatmul.mubr.f32.gmra.mrb[0].mxu0 %v487
    %v626 = vpop.f32.mrb[0].mxu0
    %v627 = vadd.f32 %v483, %v626
    %v628 = vpop.f32.mrb[0].mxu0
    %v629 = vadd.f32 %v483, %v628
    %630 = vdwg.mxu0
    %631 = vmatprep.subr.mxu0 %v445
    %632 = vmatpush1.msra.mxu0 %v444
    %633 = vmatprep.subr.mxu0 %v412
    %634 = vmatpush1.msra.mxu0 %v411
    %635 = vmatprep.subr.mxu0 %v478
    %636 = vmatpush1.msra.mxu0 %v477
    %637 = vmatprep.subr.mxu0 0.0
    %638 = vmatpush1.msra.mxu0 0.0
    %639 = vmatprep.subr.mxu0 0.0
    %640 = vmatpush1.msra.mxu0 0.0
    %641 = vmatprep.subr.mxu0 0.0
    %642 = vmatpush1.msra.mxu0 0.0
    %643 = vmatprep.subr.mxu0 0.0
    %644 = vmatpush1.msra.mxu0 0.0
    %645 = vmatprep.subr.mxu0 0.0
    %646 = vmatpush1.msra.mxu0 0.0
    %647 = vmatprep.subr.mxu0 0.0
    %648 = vmatpush1.msra.mxu0 0.0
    %649 = vmatprep.subr.mxu0 0.0
    %650 = vmatpush1.msra.mxu0 0.0
    %651 = vmatprep.subr.mxu0 0.0
    %652 = vmatpush1.msra.mxu0 0.0
    %653 = vmatprep.subr.mxu0 0.0
    %654 = vmatpush1.msra.mxu0 0.0
    %655 = vmatprep.subr.mxu0 0.0
    %656 = vmatpush1.msra.mxu0 0.0
    %657 = vmatprep.subr.mxu0 0.0
    %658 = vmatpush1.msra.mxu0 0.0
    %659 = vmatprep.subr.mxu0 0.0
    %660 = vmatpush1.msra.mxu0 0.0
    %661 = vmatprep.subr.mxu0 0.0
    %662 = vmatpush1.msra.mxu0 0.0
    %663 = vmatprep.subr.mxu0 0.0
    %664 = vmatpush1.msra.mxu0 0.0
    %665 = vmatprep.subr.mxu0 0.0
    %666 = vmatpush1.msra.mxu0 0.0
    %667 = vmatprep.subr.mxu0 0.0
    %668 = vmatpush1.msra.mxu0 0.0
    %669 = vmatprep.subr.mxu0 0.0
    %670 = vmatpush1.msra.mxu0 0.0
    %671 = vmatprep.subr.mxu0 0.0
    %672 = vmatpush1.msra.mxu0 0.0
    %673 = vmatprep.subr.mxu0 0.0
    %674 = vmatpush1.msra.mxu0 0.0
    %675 = vmatprep.subr.mxu0 0.0
    %676 = vmatpush1.msra.mxu0 0.0
    %677 = vmatprep.subr.mxu0 0.0
    %678 = vmatpush1.msra.mxu0 0.0
    %679 = vmatprep.subr.mxu0 0.0
    %680 = vmatpush1.msra.mxu0 0.0
    %681 = vmatprep.subr.mxu0 0.0
    %682 = vmatpush1.msra.mxu0 0.0
    %683 = vmatprep.subr.mxu0 0.0
    %684 = vmatpush1.msra.mxu0 0.0
    %685 = vmatprep.subr.mxu0 0.0
    %686 = vmatpush1.msra.mxu0 0.0
    %687 = vmatprep.subr.mxu0 0.0
    %688 = vmatpush1.msra.mxu0 0.0
    %689 = vmatprep.subr.mxu0 0.0
    %690 = vmatpush1.msra.mxu0 0.0
    %691 = vmatprep.subr.mxu0 0.0
    %692 = vmatpush1.msra.mxu0 0.0
    %693 = vmatprep.subr.mxu0 0.0
    %694 = vmatpush1.msra.mxu0 0.0
    %695 = vmatprep.mubr.f32.mxu0 0.0
    %696 = vmatmul.mubr.f32.gmra.mrb[0].mxu0 %v487
    %v697 = vpop.f32.mrb[0].mxu0
    %v698 = vadd.f32 %v483, %v697
    %v699 = vpop.f32.mrb[0].mxu0
    %v700 = vadd.f32 %v483, %v699
    %701 = vdwg.mxu0
    %702 = vmatprep.subr.mxu0 %v447
    %703 = vmatpush1.msra.mxu0 %v446
    %704 = vmatprep.subr.mxu0 %v414
    %705 = vmatpush1.msra.mxu0 %v413
    %706 = vmatprep.subr.mxu0 %v480
    %707 = vmatpush1.msra.mxu0 %v479
    %708 = vmatprep.subr.mxu0 0.0
    %709 = vmatpush1.msra.mxu0 0.0
    %710 = vmatprep.subr.mxu0 0.0
    %711 = vmatpush1.msra.mxu0 0.0
    %712 = vmatprep.subr.mxu0 0.0
    %713 = vmatpush1.msra.mxu0 0.0
    %714 = vmatprep.subr.mxu0 0.0
    %715 = vmatpush1.msra.mxu0 0.0
    %716 = vmatprep.subr.mxu0 0.0
    %717 = vmatpush1.msra.mxu0 0.0
    %718 = vmatprep.subr.mxu0 0.0
    %719 = vmatpush1.msra.mxu0 0.0
    %720 = vmatprep.subr.mxu0 0.0
    %721 = vmatpush1.msra.mxu0 0.0
    %722 = vmatprep.subr.mxu0 0.0
    %723 = vmatpush1.msra.mxu0 0.0
    %724 = vmatprep.subr.mxu0 0.0
    %725 = vmatpush1.msra.mxu0 0.0
    %726 = vmatprep.subr.mxu0 0.0
    %727 = vmatpush1.msra.mxu0 0.0
    %728 = vmatprep.subr.mxu0 0.0
    %729 = vmatpush1.msra.mxu0 0.0
    %730 = vmatprep.subr.mxu0 0.0
    %731 = vmatpush1.msra.mxu0 0.0
    %732 = vmatprep.subr.mxu0 0.0
    %733 = vmatpush1.msra.mxu0 0.0
    %734 = vmatprep.subr.mxu0 0.0
    %735 = vmatpush1.msra.mxu0 0.0
    %736 = vmatprep.subr.mxu0 0.0
    %737 = vmatpush1.msra.mxu0 0.0
    %738 = vmatprep.subr.mxu0 0.0
    %739 = vmatpush1.msra.mxu0 0.0
    %740 = vmatprep.subr.mxu0 0.0
    %741 = vmatpush1.msra.mxu0 0.0
    %742 = vmatprep.subr.mxu0 0.0
    %743 = vmatpush1.msra.mxu0 0.0
    %744 = vmatprep.subr.mxu0 0.0
    %745 = vmatpush1.msra.mxu0 0.0
    %746 = vmatprep.subr.mxu0 0.0
    %747 = vmatpush1.msra.mxu0 0.0
    %748 = vmatprep.subr.mxu0 0.0
    %749 = vmatpush1.msra.mxu0 0.0
    %750 = vmatprep.subr.mxu0 0.0
    %751 = vmatpush1.msra.mxu0 0.0
    %752 = vmatprep.subr.mxu0 0.0
    %753 = vmatpush1.msra.mxu0 0.0
    %754 = vmatprep.subr.mxu0 0.0
    %755 = vmatpush1.msra.mxu0 0.0
    %756 = vmatprep.subr.mxu0 0.0
    %757 = vmatpush1.msra.mxu0 0.0
    %758 = vmatprep.subr.mxu0 0.0
    %759 = vmatpush1.msra.mxu0 0.0
    %760 = vmatprep.subr.mxu0 0.0
    %761 = vmatpush1.msra.mxu0 0.0
    %762 = vmatprep.subr.mxu0 0.0
    %763 = vmatpush1.msra.mxu0 0.0
    %764 = vmatprep.subr.mxu0 0.0
    %765 = vmatpush1.msra.mxu0 0.0
    %766 = vmatprep.mubr.f32.mxu0 0.0
    %767 = vmatmul.mubr.f32.gmra.mrb[0].mxu0 %v487
    %v768 = vpop.f32.mrb[0].mxu0
    %v769 = vadd.f32 %v483, %v768
    %v770 = vpop.f32.mrb[0].mxu0
    %v771 = vadd.f32 %v483, %v770
    %772 = vdwg.mxu0
    %v773 = vmax.f32 %v556, 0.0
    %v774 = vmax.f32 %v558, 0.0
    %v775 = vmax.f32 %v627, 0.0
    %v776 = vmax.f32 %v629, 0.0
    %v777 = vmax.f32 %v698, 0.0
    %v778 = vmax.f32 %v700, 0.0
    %v779 = vmax.f32 %v769, 0.0
    %v780 = vmax.f32 %v771, 0.0
    %781 = vset.pattern.permute.xlu0 2
    %782 = vperm.xlu0 %781, %v32
    %v783 = vpop.permute.xlu0 %782
    %v786 = vsel %vm119, %v31, 0
    %788 = vmatprep.subr.mxu0 %v774
    %789 = vmatpush1.msra.mxu0 %v773
    %790 = vmatprep.subr.mxu0 0.0
    %791 = vmatpush1.msra.mxu0 0.0
    %792 = vmatprep.subr.mxu0 0.0
    %793 = vmatpush1.msra.mxu0 0.0
    %794 = vmatprep.subr.mxu0 0.0
    %795 = vmatpush1.msra.mxu0 0.0
    %796 = vmatprep.subr.mxu0 0.0
    %797 = vmatpush1.msra.mxu0 0.0
    %798 = vmatprep.subr.mxu0 0.0
    %799 = vmatpush1.msra.mxu0 0.0
    %800 = vmatprep.subr.mxu0 0.0
    %801 = vmatpush1.msra.mxu0 0.0
    %802 = vmatprep.subr.mxu0 0.0
    %803 = vmatpush1.msra.mxu0 0.0
    %804 = vmatprep.subr.mxu0 0.0
    %805 = vmatpush1.msra.mxu0 0.0
    %806 = vmatprep.subr.mxu0 0.0
    %807 = vmatpush1.msra.mxu0 0.0
    %808 = vmatprep.subr.mxu0 0.0
    %809 = vmatpush1.msra.mxu0 0.0
    %810 = vmatprep.subr.mxu0 0.0
    %811 = vmatpush1.msra.mxu0 0.0
    %812 = vmatprep.subr.mxu0 0.0
    %813 = vmatpush1.msra.mxu0 0.0
    %814 = vmatprep.subr.mxu0 0.0
    %815 = vmatpush1.msra.mxu0 0.0
    %816 = vmatprep.subr.mxu0 0.0
    %817 = vmatpush1.msra.mxu0 0.0
    %818 = vmatprep.subr.mxu0 0.0
    %819 = vmatpush1.msra.mxu0 0.0
    %820 = vmatprep.subr.mxu0 0.0
    %821 = vmatpush1.msra.mxu0 0.0
    %822 = vmatprep.subr.mxu0 0.0
    %823 = vmatpush1.msra.mxu0 0.0
    %824 = vmatprep.subr.mxu0 0.0
    %825 = vmatpush1.msra.mxu0 0.0
    %826 = vmatprep.subr.mxu0 0.0
    %827 = vmatpush1.msra.mxu0 0.0
    %828 = vmatprep.subr.mxu0 0.0
    %829 = vmatpush1.msra.mxu0 0.0
    %830 = vmatprep.subr.mxu0 0.0
    %831 = vmatpush1.msra.mxu0 0.0
    %832 = vmatprep.subr.mxu0 0.0
    %833 = vmatpush1.msra.mxu0 0.0
    %834 = vmatprep.subr.mxu0 0.0
    %835 = vmatpush1.msra.mxu0 0.0
    %836 = vmatprep.subr.mxu0 0.0
    %837 = vmatpush1.msra.mxu0 0.0
    %838 = vmatprep.subr.mxu0 0.0
    %839 = vmatpush1.msra.mxu0 0.0
    %840 = vmatprep.subr.mxu0 0.0
    %841 = vmatpush1.msra.mxu0 0.0
    %842 = vmatprep.subr.mxu0 0.0
    %843 = vmatpush1.msra.mxu0 0.0
    %844 = vmatprep.subr.mxu0 0.0
    %845 = vmatpush1.msra.mxu0 0.0
    %846 = vmatprep.subr.mxu0 0.0
    %847 = vmatpush1.msra.mxu0 0.0
    %848 = vmatprep.subr.mxu0 0.0
    %849 = vmatpush1.msra.mxu0 0.0
    %850 = vmatprep.subr.mxu0 0.0
    %851 = vmatpush1.msra.mxu0 0.0
    %852 = vmatprep.mubr.f32.mxu0 0.0
    %853 = vmatmul.mubr.f32.gmra.mrb[0].mxu0 %v786
    %v854 = vpop.f32.mrb[0].mxu0
    %v855 = vadd.f32 %v783, %v854
    %v856 = vpop.f32.mrb[0].mxu0
    %v857 = vadd.f32 %v783, %v856
    %858 = vdwg.mxu0
    %859 = vmatprep.subr.mxu0 %v776
    %860 = vmatpush1.msra.mxu0 %v775
    %861 = vmatprep.subr.mxu0 0.0
    %862 = vmatpush1.msra.mxu0 0.0
    %863 = vmatprep.subr.mxu0 0.0
    %864 = vmatpush1.msra.mxu0 0.0
    %865 = vmatprep.subr.mxu0 0.0
    %866 = vmatpush1.msra.mxu0 0.0
    %867 = vmatprep.subr.mxu0 0.0
    %868 = vmatpush1.msra.mxu0 0.0
    %869 = vmatprep.subr.mxu0 0.0
    %870 = vmatpush1.msra.mxu0 0.0
    %871 = vmatprep.subr.mxu0 0.0
    %872 = vmatpush1.msra.mxu0 0.0
    %873 = vmatprep.subr.mxu0 0.0
    %874 = vmatpush1.msra.mxu0 0.0
    %875 = vmatprep.subr.mxu0 0.0
    %876 = vmatpush1.msra.mxu0 0.0
    %877 = vmatprep.subr.mxu0 0.0
    %878 = vmatpush1.msra.mxu0 0.0
    %879 = vmatprep.subr.mxu0 0.0
    %880 = vmatpush1.msra.mxu0 0.0
    %881 = vmatprep.subr.mxu0 0.0
    %882 = vmatpush1.msra.mxu0 0.0
    %883 = vmatprep.subr.mxu0 0.0
    %884 = vmatpush1.msra.mxu0 0.0
    %885 = vmatprep.subr.mxu0 0.0
    %886 = vmatpush1.msra.mxu0 0.0
    %887 = vmatprep.subr.mxu0 0.0
    %888 = vmatpush1.msra.mxu0 0.0
    %889 = vmatprep.subr.mxu0 0.0
    %890 = vmatpush1.msra.mxu0 0.0
    %891 = vmatprep.subr.mxu0 0.0
    %892 = vmatpush1.msra.mxu0 0.0
    %893 = vmatprep.subr.mxu0 0.0
    %894 = vmatpush1.msra.mxu0 0.0
    %895 = vmatprep.subr.mxu0 0.0
    %896 = vmatpush1.msra.mxu0 0.0
    %897 = vmatprep.subr.mxu0 0.0
    %898 = vmatpush1.msra.mxu0 0.0
    %899 = vmatprep.subr.mxu0 0.0
    %900 = vmatpush1.msra.mxu0 0.0
    %901 = vmatprep.subr.mxu0 0.0
    %902 = vmatpush1.msra.mxu0 0.0
    %903 = vmatprep.subr.mxu0 0.0
    %904 = vmatpush1.msra.mxu0 0.0
    %905 = vmatprep.subr.mxu0 0.0
    %906 = vmatpush1.msra.mxu0 0.0
    %907 = vmatprep.subr.mxu0 0.0
    %908 = vmatpush1.msra.mxu0 0.0
    %909 = vmatprep.subr.mxu0 0.0
    %910 = vmatpush1.msra.mxu0 0.0
    %911 = vmatprep.subr.mxu0 0.0
    %912 = vmatpush1.msra.mxu0 0.0
    %913 = vmatprep.subr.mxu0 0.0
    %914 = vmatpush1.msra.mxu0 0.0
    %915 = vmatprep.subr.mxu0 0.0
    %916 = vmatpush1.msra.mxu0 0.0
    %917 = vmatprep.subr.mxu0 0.0
    %918 = vmatpush1.msra.mxu0 0.0
    %919 = vmatprep.subr.mxu0 0.0
    %920 = vmatpush1.msra.mxu0 0.0
    %921 = vmatprep.subr.mxu0 0.0
    %922 = vmatpush1.msra.mxu0 0.0
    %923 = vmatprep.mubr.f32.mxu0 0.0
    %924 = vmatmul.mubr.f32.gmra.mrb[0].mxu0 %v786
    %v925 = vpop.f32.mrb[0].mxu0
    %v926 = vadd.f32 %v783, %v925
    %v927 = vpop.f32.mrb[0].mxu0
    %v928 = vadd.f32 %v783, %v927
    %929 = vdwg.mxu0
    %930 = vmatprep.subr.mxu0 %v778
    %931 = vmatpush1.msra.mxu0 %v777
    %932 = vmatprep.subr.mxu0 0.0
    %933 = vmatpush1.msra.mxu0 0.0
    %934 = vmatprep.subr.mxu0 0.0
    %935 = vmatpush1.msra.mxu0 0.0
    %936 = vmatprep.subr.mxu0 0.0
    %937 = vmatpush1.msra.mxu0 0.0
    %938 = vmatprep.subr.mxu0 0.0
    %939 = vmatpush1.msra.mxu0 0.0
    %940 = vmatprep.subr.mxu0 0.0
    %941 = vmatpush1.msra.mxu0 0.0
    %942 = vmatprep.subr.mxu0 0.0
    %943 = vmatpush1.msra.mxu0 0.0
    %944 = vmatprep.subr.mxu0 0.0
    %945 = vmatpush1.msra.mxu0 0.0
    %946 = vmatprep.subr.mxu0 0.0
    %947 = vmatpush1.msra.mxu0 0.0
    %948 = vmatprep.subr.mxu0 0.0
    %949 = vmatpush1.msra.mxu0 0.0
    %950 = vmatprep.subr.mxu0 0.0
    %951 = vmatpush1.msra.mxu0 0.0
    %952 = vmatprep.subr.mxu0 0.0
    %953 = vmatpush1.msra.mxu0 0.0
    %954 = vmatprep.subr.mxu0 0.0
    %955 = vmatpush1.msra.mxu0 0.0
    %956 = vmatprep.subr.mxu0 0.0
    %957 = vmatpush1.msra.mxu0 0.0
    %958 = vmatprep.subr.mxu0 0.0
    %959 = vmatpush1.msra.mxu0 0.0
    %960 = vmatprep.subr.mxu0 0.0
    %961 = vmatpush1.msra.mxu0 0.0
    %962 = vmatprep.subr.mxu0 0.0
    %963 = vmatpush1.msra.mxu0 0.0
    %964 = vmatprep.subr.mxu0 0.0
    %965 = vmatpush1.msra.mxu0 0.0
    %966 = vmatprep.subr.mxu0 0.0
    %967 = vmatpush1.msra.mxu0 0.0
    %968 = vmatprep.subr.mxu0 0.0
    %969 = vmatpush1.msra.mxu0 0.0
    %970 = vmatprep.subr.mxu0 0.0
    %971 = vmatpush1.msra.mxu0 0.0
    %972 = vmatprep.subr.mxu0 0.0
    %973 = vmatpush1.msra.mxu0 0.0
    %974 = vmatprep.subr.mxu0 0.0
    %975 = vmatpush1.msra.mxu0 0.0
    %976 = vmatprep.subr.mxu0 0.0
    %977 = vmatpush1.msra.mxu0 0.0
    %978 = vmatprep.subr.mxu0 0.0
    %979 = vmatpush1.msra.mxu0 0.0
    %980 = vmatprep.subr.mxu0 0.0
    %981 = vmatpush1.msra.mxu0 0.0
    %982 = vmatprep.subr.mxu0 0.0
    %983 = vmatpush1.msra.mxu0 0.0
    %984 = vmatprep.subr.mxu0 0.0
    %985 = vmatpush1.msra.mxu0 0.0
    %986 = vmatprep.subr.mxu0 0.0
    %987 = vmatpush1.msra.mxu0 0.0
    %988 = vmatprep.subr.mxu0 0.0
    %989 = vmatpush1.msra.mxu0 0.0
    %990 = vmatprep.subr.mxu0 0.0
    %991 = vmatpush1.msra.mxu0 0.0
    %992 = vmatprep.subr.mxu0 0.0
    %993 = vmatpush1.msra.mxu0 0.0
    %994 = vmatprep.mubr.f32.mxu0 0.0
    %995 = vmatmul.mubr.f32.gmra.mrb[0].mxu0 %v786
    %v996 = vpop.f32.mrb[0].mxu0
    %v997 = vadd.f32 %v783, %v996
    %v998 = vpop.f32.mrb[0].mxu0
    %v999 = vadd.f32 %v783, %v998
    %1000 = vdwg.mxu0
    %1001 = vmatprep.subr.mxu0 %v780
    %1002 = vmatpush1.msra.mxu0 %v779
    %1003 = vmatprep.subr.mxu0 0.0
    %1004 = vmatpush1.msra.mxu0 0.0
    %1005 = vmatprep.subr.mxu0 0.0
    %1006 = vmatpush1.msra.mxu0 0.0
    %1007 = vmatprep.subr.mxu0 0.0
    %1008 = vmatpush1.msra.mxu0 0.0
    %1009 = vmatprep.subr.mxu0 0.0
    %1010 = vmatpush1.msra.mxu0 0.0
    %1011 = vmatprep.subr.mxu0 0.0
    %1012 = vmatpush1.msra.mxu0 0.0
    %1013 = vmatprep.subr.mxu0 0.0
    %1014 = vmatpush1.msra.mxu0 0.0
    %1015 = vmatprep.subr.mxu0 0.0
    %1016 = vmatpush1.msra.mxu0 0.0
    %1017 = vmatprep.subr.mxu0 0.0
    %1018 = vmatpush1.msra.mxu0 0.0
    %1019 = vmatprep.subr.mxu0 0.0
    %1020 = vmatpush1.msra.mxu0 0.0
    %1021 = vmatprep.subr.mxu0 0.0
    %1022 = vmatpush1.msra.mxu0 0.0
    %1023 = vmatprep.subr.mxu0 0.0
    %1024 = vmatpush1.msra.mxu0 0.0
    %1025 = vmatprep.subr.mxu0 0.0
    %1026 = vmatpush1.msra.mxu0 0.0
    %1027 = vmatprep.subr.mxu0 0.0
    %1028 = vmatpush1.msra.mxu0 0.0
    %1029 = vmatprep.subr.mxu0 0.0
    %1030 = vmatpush1.msra.mxu0 0.0
    %1031 = vmatprep.subr.mxu0 0.0
    %1032 = vmatpush1.msra.mxu0 0.0
    %1033 = vmatprep.subr.mxu0 0.0
    %1034 = vmatpush1.msra.mxu0 0.0
    %1035 = vmatprep.subr.mxu0 0.0
    %1036 = vmatpush1.msra.mxu0 0.0
    %1037 = vmatprep.subr.mxu0 0.0
    %1038 = vmatpush1.msra.mxu0 0.0
    %1039 = vmatprep.subr.mxu0 0.0
    %1040 = vmatpush1.msra.mxu0 0.0
    %1041 = vmatprep.subr.mxu0 0.0
    %1042 = vmatpush1.msra.mxu0 0.0
    %1043 = vmatprep.subr.mxu0 0.0
    %1044 = vmatpush1.msra.mxu0 0.0
    %1045 = vmatprep.subr.mxu0 0.0
    %1046 = vmatpush1.msra.mxu0 0.0
    %1047 = vmatprep.subr.mxu0 0.0
    %1048 = vmatpush1.msra.mxu0 0.0
    %1049 = vmatprep.subr.mxu0 0.0
    %1050 = vmatpush1.msra.mxu0 0.0
    %1051 = vmatprep.subr.mxu0 0.0
    %1052 = vmatpush1.msra.mxu0 0.0
    %1053 = vmatprep.subr.mxu0 0.0
    %1054 = vmatpush1.msra.mxu0 0.0
    %1055 = vmatprep.subr.mxu0 0.0
    %1056 = vmatpush1.msra.mxu0 0.0
    %1057 = vmatprep.subr.mxu0 0.0
    %1058 = vmatpush1.msra.mxu0 0.0
    %1059 = vmatprep.subr.mxu0 0.0
    %1060 = vmatpush1.msra.mxu0 0.0
    %1061 = vmatprep.subr.mxu0 0.0
    %1062 = vmatpush1.msra.mxu0 0.0
    %1063 = vmatprep.subr.mxu0 0.0
    %1064 = vmatpush1.msra.mxu0 0.0
    %1065 = vmatprep.mubr.f32.mxu0 0.0
    %1066 = vmatmul.mubr.f32.gmra.mrb[0].mxu0 %v786
    %v1067 = vpop.f32.mrb[0].mxu0
    %v1068 = vadd.f32 %v783, %v1067
    %v1069 = vpop.f32.mrb[0].mxu0
    %v1070 = vadd.f32 %v783, %v1069
    %1071 = vdwg.mxu0
    %v1072 = vadd.f32 %v855, %v21
    %v1073 = vadd.f32 %v857, %v22
    %v1074 = vadd.f32 %v926, %v23
    %v1075 = vadd.f32 %v928, %v24
    %v1076 = vadd.f32 %v997, %v25
    %v1077 = vadd.f32 %v999, %v26
    %v1078 = vadd.f32 %v1068, %v27
    %v1079 = vadd.f32 %v1070, %v28
    %v1080 = vmax.f32 %v1072, 0.0
    %v1081 = vmax.f32 %v1073, 0.0
    %v1082 = vmax.f32 %v1074, 0.0
    %v1083 = vmax.f32 %v1075, 0.0
    %v1084 = vmax.f32 %v1076, 0.0
    %v1085 = vmax.f32 %v1077, 0.0
    %v1086 = vmax.f32 %v1078, 0.0
    %v1087 = vmax.f32 %v1079, 0.0
    %1088 = vst [vmem:[#allocation2] sm:$0xff] %v1080
    %1089 = vst [vmem:[#allocation2 + $0x8] sm:$0xff] %v1081
    %1090 = vst [vmem:[#allocation2 + $0x10] sm:$0xff] %v1082
    %1091 = vst [vmem:[#allocation2 + $0x18] sm:$0xff] %v1083
    %1092 = vst [vmem:[#allocation2 + $0x20] sm:$0xff] %v1084
    %1093 = vst [vmem:[#allocation2 + $0x28] sm:$0xff] %v1085
    %1094 = vst [vmem:[#allocation2 + $0x30] sm:$0xff] %v1086
    %1095 = vst [vmem:[#allocation2 + $0x38] sm:$0xff] %v1087
    // Predicated region
    $region22: #{bottleneck_residual_block3.1} parent=1 // pred_check
      _
    $region23: #{bottleneck_residual_block3.1} parent=1 // pred_check_branch
      %1097 = sbr.rel (0) target = $region25
    $region24: #{bottleneck_residual_block3.1} parent=1 // pred_region
      %s1099 = ssub.s32 1024, 1024
      %1100 = vsyncadd [#allocation3], %s1099
      %s1102 = sshll.u32 [#allocation2], 4
      %s1103 = int_to_ptr.vmem [resolvable:$true] %s1102
      %1105 = dma.vmem_to_hbm [thread:$0]  %s1103, 1024, %s5, [#allocation3]
    $region25: #{bottleneck_residual_block3.1} parent=1 // pred_fallthru
      _
    // Predicated region
    $region26: #{bottleneck_residual_block3.1} parent=1 // pred_check
      _
    $region27: #{bottleneck_residual_block3.1} parent=1 // pred_check_branch
      %1107 = sbr.rel (0) target = $region29
    $region28: #{bottleneck_residual_block3.1} parent=1 // pred_region
      %1108 = dma.done [#allocation3], 1024
    $region29: #{bottleneck_residual_block3.1} parent=1 // pred_fallthru
      _
    %1109 = vsyncpa [#allocation3], 1

</llo_original>
